<compile_context>
chip_gen: v6e
topology: v6e:2x2x1
jax: 0.10.0
libtpu: 0.0.40
codegen_flags: <defaults>
</compile_context>

<pallas_src>
import numpy as np
import jax
import jax.numpy as jnp
from jax.experimental import pallas as pl
from jax.experimental.pallas import tpu as pltpu

# ---------------- module "args" (synthetic, deterministic) ----------------
P_MAX = 5.0                   # args.P_max
NORMALIZED_MU = 1.0           # self.normalized_mu
DUAL_HIDDEN_SIZE = 32         # args.dual_hidden_size
DUAL_NUM_SUBLAYERS = 2        # args.dual_num_sublayers
DUAL_NUM_BLOCKS = 2           # args.dual_num_blocks
N_PER_GRAPH = 8               # args.n
CONSTRAINED_SUBNETWORK = 0.5  # args.constrained_subnetwork
NUM_GRAPHS = 32               # 32 graphs -> 2 lane-dense super-blocks (grid=2)


# ---------------- Pallas kernel (B graphs per grid step) ----------------
def make_dual_block_kernel(n, graphs_per_step, hidden):
    """Kernel refs (per grid step s):
      a_ref   : (B, n, n)      A blocks (untransposed) for the B graphs of step s
      x_ref   : (1, 2, B*n)    row 0 = p, row 1 = mu (graphs packed along lanes)
      w_ref   : (H+1, W)       packed parameter slab + constrained-subnetwork mask
      out_ref : (1, 1, B*n)    new duals, lane-dense
      bd_ref  : (B*n, B*n)     VMEM scratch for the block-diagonal adjacency tile
    """
    B, H = graphs_per_step, hidden
    BN = B * n

    def kernel(a_ref, x_ref, w_ref, out_ref, bd_ref):
        # Assemble the (BN, BN) block-diagonal adjacency tile for this
        # super-block in VMEM.  Off-diagonal zeros are re-written every step so
        # the kernel is correct under "parallel" grid semantics (no cross-step
        # scratch dependency).
        bd_ref[...] = jnp.zeros_like(bd_ref)
        for b in range(B):
            bd_ref[b * n:(b + 1) * n, b * n:(b + 1) * n] = a_ref[b]
        a_bd = bd_ref[...]                                   # (BN, BN) f32

        # Packed, resident parameter slab (scalings already folded on host).
        w1t  = w_ref[0:H, 0:H]                               # (H, H) = W1^T
        w0p  = w_ref[0:H, H:H + 1]                           # (H, 1) = W0[0,:]^T / P_max
        w0m  = w_ref[0:H, H + 1:H + 2]                       # (H, 1) = W0[1,:]^T / norm_mu
        b0t  = w_ref[0:H, H + 2:H + 3]                       # (H, 1)
        b1t  = w_ref[0:H, H + 3:H + 4]                       # (H, 1)
        wo   = w_ref[0:H, H + 4:H + 5]                       # (H, 1) = wo * norm_mu
        bo   = w_ref[0:1, H + 5:H + 6]                       # (1, 1) = bo * norm_mu
        mask = w_ref[H:H + 1, 0:BN]                          # (1, BN) constrained mask

        p_row  = x_ref[0, 0:1, :]                            # (1, BN)
        mu_row = x_ref[0, 1:2, :]                            # (1, BN)

        # Input transform (K=2) as two rank-1 VPU broadcast MACs (no K=2 MXU dot).
        h = w0p * p_row + w0m * mu_row                       # (H, BN) f32

        # (A @ H)^T: contract A's second axis (no transpose pass over A anywhere);
        # the block-diagonal tile does all B graphs in one MXU contraction.
        dn = (((1,), (1,)), ((), ()))
        h = jax.lax.dot_general(h, a_bd, dn, preferred_element_type=jnp.float32)
        h = jnp.maximum(h + b0t, 0.0)

        # Sublayer 1: W1^T @ H^T, message passing, bias, relu.
        h = jnp.dot(w1t, h, preferred_element_type=jnp.float32)
        h = jax.lax.dot_general(h, a_bd, dn, preferred_element_type=jnp.float32)
        h = jnp.maximum(h + b1t, 0.0)

        # Readout (activation=None): VPU multiply + sublane reduce -> (1, BN),
        # then the precomputed constrained-subnetwork mask as one vreg multiply.
        mu_out = jnp.sum(h * wo, axis=0, keepdims=True) + bo
        out_ref[0] = mu_out * mask

    return kernel


# ---------------- host-side parameter packing ----------------
def _pack_param_slab(block_params, block_id, n, graphs_per_step,
                     constrained_subnetwork):
    """One f32 slab (H+1, max(B*n, H+6)):
      [0:H, 0:H]    W1^T
      [0:H, H]      W0[0,:] / P_max        (multiplies p)
      [0:H, H+1]    W0[1,:] / normalized_mu (multiplies mu)
      [0:H, H+2]    b0
      [0:H, H+3]    b1
      [0:H, H+4]    wo * normalized_mu
      [0:H, H+5]    bo * normalized_mu (broadcast)
      [H,   0:B*n]  constrained-subnetwork lane mask (0/1)
    """
    w0, b0, w1, b1, wo, bo = block_params[block_id]
    H = w1.shape[0]
    B = graphs_per_step
    BN = B * n
    slab_w = max(BN, H + 6)

    slab = jnp.zeros((H + 1, slab_w), jnp.float32)
    slab = slab.at[0:H, 0:H].set(jnp.transpose(w1))
    slab = slab.at[0:H, H].set(w0[0] / P_MAX)
    slab = slab.at[0:H, H + 1].set(w0[1] / NORMALIZED_MU)
    slab = slab.at[0:H, H + 2].set(b0.reshape(-1))
    slab = slab.at[0:H, H + 3].set(b1.reshape(-1))
    slab = slab.at[0:H, H + 4].set(wo.reshape(-1) * NORMALIZED_MU)
    slab = slab.at[0:H, H + 5].set(bo.reshape(()) * NORMALIZED_MU)

    if constrained_subnetwork < 1:
        n_constr = int(np.floor(constrained_subnetwork * n))
    else:
        n_constr = n
    mask = np.tile((np.arange(n) < n_constr).astype(np.float32), B)   # (BN,)
    slab = slab.at[H, 0:BN].set(jnp.asarray(mask))
    return slab, H


# ---------------- wrapper ----------------
def dual_model_forward(block_id, mu, p, adjacency, block_params,
                       n=N_PER_GRAPH,
                       constrained_subnetwork=CONSTRAINED_SUBNETWORK):
    """Pallas equivalent of DualModel.forward for one dual block.

    adjacency: (num_graphs, n, n) dense per-graph weighted adjacency blocks (A).
    mu, p    : (num_graphs * n, 1) as in the reference forward.
    Returns  : (num_graphs * n, 1) new dual variables.
    """
    num_graphs = adjacency.shape[0]
    N = num_graphs * n
    assert mu.shape == (N, 1) and p.shape == (N, 1)

    # Batch graphs along the lane axis: B*n lanes per grid step (128 when n|128).
    B = max(1, 128 // n)
    g_pad = ((num_graphs + B - 1) // B) * B
    if g_pad != num_graphs:
        pad_g = g_pad - num_graphs
        adjacency = jnp.concatenate(
            [adjacency, jnp.zeros((pad_g, n, n), adjacency.dtype)], axis=0)
        pad_nodes = jnp.zeros((pad_g * n, 1), mu.dtype)
        mu = jnp.concatenate([mu, pad_nodes], axis=0)
        p = jnp.concatenate([p, pad_nodes], axis=0)
    num_super = g_pad // B
    BN = B * n

    adjacency = adjacency.astype(jnp.float32)   # no-op when already f32; no transpose
    slab, H = _pack_param_slab(block_params, block_id, n, B, constrained_subnetwork)

    # p and mu packed together: one (num_super, 2, BN) input, graphs along lanes.
    x = jnp.stack([p.astype(jnp.float32).reshape(num_super, BN),
                   mu.astype(jnp.float32).reshape(num_super, BN)], axis=1)

    kernel = make_dual_block_kernel(n, B, H)

    out = pl.pallas_call(
        kernel,
        out_shape=jax.ShapeDtypeStruct((num_super, 1, BN), jnp.float32),
        grid_spec=pltpu.PrefetchScalarGridSpec(
            num_scalar_prefetch=0,
            grid=(num_super,),
            in_specs=[
                pl.BlockSpec((B, n, n), lambda s: (s, 0, 0)),     # A blocks of step s
                pl.BlockSpec((1, 2, BN), lambda s: (s, 0, 0)),    # [p; mu] rows
                pl.BlockSpec(slab.shape, lambda s: (0, 0)),       # packed params (resident)
            ],
            out_specs=pl.BlockSpec((1, 1, BN), lambda s: (s, 0, 0)),
            scratch_shapes=[pltpu.VMEM((BN, BN), jnp.float32)],   # block-diag A tile
        ),
        compiler_params=pltpu.CompilerParams(
            dimension_semantics=("parallel",),    # v7x: split super-blocks across 2 TCs
        ),
    )(adjacency, x, slab)

    return out.reshape(g_pad * n, 1)[:N]


# ---------------- pure-JAX reference (f32, highest precision) ----------------
def dual_model_forward_ref(block_id, mu, p, adjacency, block_params,
                           n=N_PER_GRAPH,
                           constrained_subnetwork=CONSTRAINED_SUBNETWORK):
    w0, b0, w1, b1, wo, bo = block_params[block_id]
    G = adjacency.shape[0]
    N = G * n
    hp = jax.lax.Precision.HIGHEST
    x = jnp.concatenate([p / P_MAX, mu / NORMALIZED_MU], axis=1)       # (N, 2)
    xg = x.reshape(G, n, 2)
    h = jnp.einsum('gij,gjf->gif', adjacency,
                   jnp.einsum('gnf,fh->gnh', xg, w0, precision=hp),
                   precision=hp) + b0
    h = jnp.maximum(h, 0.0)
    h = jnp.einsum('gij,gjf->gif', adjacency,
                   jnp.einsum('gnf,fh->gnh', h, w1, precision=hp),
                   precision=hp) + b1
    h = jnp.maximum(h, 0.0)
    mu_out = (jnp.einsum('gnf,fo->gno', h, wo, precision=hp) + bo).reshape(G, n)
    if constrained_subnetwork < 1:
        k = int(np.floor(constrained_subnetwork * n))
        mu_out = mu_out * (jnp.arange(n) < k).astype(mu_out.dtype)
    return (mu_out * NORMALIZED_MU).reshape(N, 1)


# ---------------- glue: params + graph construction (plain JAX) ----------------
def init_block_params(key, hidden=DUAL_HIDDEN_SIZE):
    ks = jax.random.split(key, 3)
    w0 = 0.1 * jax.random.normal(ks[0], (2, hidden), jnp.float32)
    b0 = jnp.zeros((1, hidden), jnp.float32)
    w1 = 0.1 * jax.random.normal(ks[1], (hidden, hidden), jnp.float32)
    b1 = jnp.zeros((1, hidden), jnp.float32)
    wo = 0.1 * jax.random.normal(ks[2], (hidden, 1), jnp.float32)
    bo = jnp.zeros((1, 1), jnp.float32)
    return (w0, b0, w1, b1, wo, bo)


def dense_block_adjacency(edge_index, edge_weight, num_graphs, n):
    """Global (2, E) edge list over a block-diagonal batch -> (G, n, n) blocks.
    Duplicate edges accumulate (.add, not .set)."""
    src = np.asarray(edge_index[0])
    dst = np.asarray(edge_index[1])
    # block-diagonal sanity: every edge must stay inside its own graph
    assert np.all(src // n == dst // n), "cross-graph edge in block-diagonal batch"
    g = src // n
    a = jnp.zeros((num_graphs, n, n), jnp.float32)
    return a.at[g, src % n, dst % n].add(edge_weight)


if __name__ == "__main__":
    key = jax.random.PRNGKey(0)
    k_mu, k_p, k_w, *k_blocks = jax.random.split(key, 3 + DUAL_NUM_BLOCKS)

    N = NUM_GRAPHS * N_PER_GRAPH  # total nodes across the batch of graphs

    # per-node duals and powers, shape (N, 1) as in the reference forward
    mu = 0.1 * jax.random.uniform(k_mu, (N, 1), jnp.float32)
    p = P_MAX * jax.random.uniform(k_p, (N, 1), jnp.float32)

    # block-diagonal fully connected graphs with random edge weights
    # — stands in for (edge_index_l, edge_weight_l).
    src, dst = [], []
    for g in range(NUM_GRAPHS):
        base = g * N_PER_GRAPH
        for i in range(N_PER_GRAPH):
            for j in range(N_PER_GRAPH):
                src.append(base + i)
                dst.append(base + j)
    edge_index = np.array([src, dst], dtype=np.int32)
    edge_weight = jax.random.uniform(k_w, (edge_index.shape[1],), jnp.float32)
    adjacency = dense_block_adjacency(edge_index, edge_weight, NUM_GRAPHS, N_PER_GRAPH)

    # deterministic per-block parameters (self.blocks)
    block_params = [init_block_params(kb) for kb in k_blocks]

    block_id = 0
    out = dual_model_forward(block_id, mu, p, adjacency, block_params)
    out = jax.block_until_ready(out)

    assert out.shape == (N, 1)

    # masked tail of every graph must be exactly zero
    n_constr = int(np.floor(CONSTRAINED_SUBNETWORK * N_PER_GRAPH))
    tail = np.asarray(out).reshape(NUM_GRAPHS, N_PER_GRAPH)[:, n_constr:]
    assert np.all(tail == 0.0)

    # numeric check vs. highest-precision f32 pure-JAX reference (kernel is
    # f32 end-to-end now, so the tolerance is much tighter than the bf16 v1)
    ref = dual_model_forward_ref(block_id, mu, p, adjacency, block_params)
    np.testing.assert_allclose(np.asarray(out), np.asarray(ref), rtol=1e-3, atol=1e-4)

    print("KERNEL_OK")
</pallas_src>

<mosaic_0001>
module attributes {stable_mosaic.version = 11 : i64} {
  func.func @kernel(%arg0: i32, %arg1: memref<16x8x8xf32, #tpu.memory_space<vmem>>, %arg2: memref<1x2x128xf32, #tpu.memory_space<vmem>>, %arg3: memref<33x128xf32, #tpu.memory_space<vmem>>, %arg4: memref<1x1x128xf32, #tpu.memory_space<vmem>>, %arg5: memref<128x128xf32, #tpu.memory_space<vmem>>) attributes {dimension_semantics = [#tpu.dimension_semantics<parallel>], iteration_bounds = array<i64: 2>, scalar_prefetch = 0 : i64, scratch_operands = 1 : i64, tpu.core_type = #tpu.core_type<tc>, window_params = [{transform_indices = @transform_0, window_bounds = array<i64: 16, 8, 8>}, {transform_indices = @transform_1, window_bounds = array<i64: 1, 2, 128>}, {pipeline_mode = #tpu.pipeline_mode<synchronous>, transform_indices = @transform_2, window_bounds = array<i64: 33, 128>}, {transform_indices = @transform_3, window_bounds = array<i64: 1, 1, 128>}]} {
    %cst = arith.constant 0.000000e+00 : f32
    %0 = vector.broadcast %cst : f32 to vector<128x128xf32>
    %c0 = arith.constant 0 : index
    %c0_0 = arith.constant 0 : index
    %1 = vector.load %arg5[%c0, %c0_0] : memref<128x128xf32, #tpu.memory_space<vmem>>, vector<128x128xf32>
    tpu.vector_store %arg5[%c0, %c0_0], %0 {strides = array<i32>} : memref<128x128xf32, #tpu.memory_space<vmem>>, vector<128x128xf32>,
    %c0_1 = arith.constant 0 : index
    %c0_2 = arith.constant 0 : index
    %c0_3 = arith.constant 0 : index
    %2 = vector.load %arg1[%c0_1, %c0_2, %c0_3] : memref<16x8x8xf32, #tpu.memory_space<vmem>>, vector<1x8x8xf32>
    %3 = vector.shape_cast %2 : vector<1x8x8xf32> to vector<8x8xf32>
    %c0_4 = arith.constant 0 : index
    %c0_5 = arith.constant 0 : index
    %4 = vector.load %arg5[%c0_4, %c0_5] : memref<128x128xf32, #tpu.memory_space<vmem>>, vector<8x8xf32>
    tpu.vector_store %arg5[%c0_4, %c0_5], %3 {strides = array<i32>} : memref<128x128xf32, #tpu.memory_space<vmem>>, vector<8x8xf32>,
    %c1 = arith.constant 1 : index
    %c0_6 = arith.constant 0 : index
    %c0_7 = arith.constant 0 : index
    %5 = vector.load %arg1[%c1, %c0_6, %c0_7] : memref<16x8x8xf32, #tpu.memory_space<vmem>>, vector<1x8x8xf32>
    %6 = vector.shape_cast %5 : vector<1x8x8xf32> to vector<8x8xf32>
    %c8 = arith.constant 8 : index
    %c8_8 = arith.constant 8 : index
    %7 = vector.load %arg5[%c8, %c8_8] : memref<128x128xf32, #tpu.memory_space<vmem>>, vector<8x8xf32>
    tpu.vector_store %arg5[%c8, %c8_8], %6 {strides = array<i32>} : memref<128x128xf32, #tpu.memory_space<vmem>>, vector<8x8xf32>,
    %c2 = arith.constant 2 : index
    %c0_9 = arith.constant 0 : index
    %c0_10 = arith.constant 0 : index
    %8 = vector.load %arg1[%c2, %c0_9, %c0_10] : memref<16x8x8xf32, #tpu.memory_space<vmem>>, vector<1x8x8xf32>
    %9 = vector.shape_cast %8 : vector<1x8x8xf32> to vector<8x8xf32>
    %c16 = arith.constant 16 : index
    %c16_11 = arith.constant 16 : index
    %10 = vector.load %arg5[%c16, %c16_11] : memref<128x128xf32, #tpu.memory_space<vmem>>, vector<8x8xf32>
    tpu.vector_store %arg5[%c16, %c16_11], %9 {strides = array<i32>} : memref<128x128xf32, #tpu.memory_space<vmem>>, vector<8x8xf32>,
    %c3 = arith.constant 3 : index
    %c0_12 = arith.constant 0 : index
    %c0_13 = arith.constant 0 : index
    %11 = vector.load %arg1[%c3, %c0_12, %c0_13] : memref<16x8x8xf32, #tpu.memory_space<vmem>>, vector<1x8x8xf32>
    %12 = vector.shape_cast %11 : vector<1x8x8xf32> to vector<8x8xf32>
    %c24 = arith.constant 24 : index
    %c24_14 = arith.constant 24 : index
    %13 = vector.load %arg5[%c24, %c24_14] : memref<128x128xf32, #tpu.memory_space<vmem>>, vector<8x8xf32>
    tpu.vector_store %arg5[%c24, %c24_14], %12 {strides = array<i32>} : memref<128x128xf32, #tpu.memory_space<vmem>>, vector<8x8xf32>,
    %c4 = arith.constant 4 : index
    %c0_15 = arith.constant 0 : index
    %c0_16 = arith.constant 0 : index
    %14 = vector.load %arg1[%c4, %c0_15, %c0_16] : memref<16x8x8xf32, #tpu.memory_space<vmem>>, vector<1x8x8xf32>
    %15 = vector.shape_cast %14 : vector<1x8x8xf32> to vector<8x8xf32>
    %c32 = arith.constant 32 : index
    %c32_17 = arith.constant 32 : index
    %16 = vector.load %arg5[%c32, %c32_17] : memref<128x128xf32, #tpu.memory_space<vmem>>, vector<8x8xf32>
    tpu.vector_store %arg5[%c32, %c32_17], %15 {strides = array<i32>} : memref<128x128xf32, #tpu.memory_space<vmem>>, vector<8x8xf32>,
    %c5 = arith.constant 5 : index
    %c0_18 = arith.constant 0 : index
    %c0_19 = arith.constant 0 : index
    %17 = vector.load %arg1[%c5, %c0_18, %c0_19] : memref<16x8x8xf32, #tpu.memory_space<vmem>>, vector<1x8x8xf32>
    %18 = vector.shape_cast %17 : vector<1x8x8xf32> to vector<8x8xf32>
    %c40 = arith.constant 40 : index
    %c40_20 = arith.constant 40 : index
    %19 = vector.load %arg5[%c40, %c40_20] : memref<128x128xf32, #tpu.memory_space<vmem>>, vector<8x8xf32>
    tpu.vector_store %arg5[%c40, %c40_20], %18 {strides = array<i32>} : memref<128x128xf32, #tpu.memory_space<vmem>>, vector<8x8xf32>,
    %c6 = arith.constant 6 : index
    %c0_21 = arith.constant 0 : index
    %c0_22 = arith.constant 0 : index
    %20 = vector.load %arg1[%c6, %c0_21, %c0_22] : memref<16x8x8xf32, #tpu.memory_space<vmem>>, vector<1x8x8xf32>
    %21 = vector.shape_cast %20 : vector<1x8x8xf32> to vector<8x8xf32>
    %c48 = arith.constant 48 : index
    %c48_23 = arith.constant 48 : index
    %22 = vector.load %arg5[%c48, %c48_23] : memref<128x128xf32, #tpu.memory_space<vmem>>, vector<8x8xf32>
    tpu.vector_store %arg5[%c48, %c48_23], %21 {strides = array<i32>} : memref<128x128xf32, #tpu.memory_space<vmem>>, vector<8x8xf32>,
    %c7 = arith.constant 7 : index
    %c0_24 = arith.constant 0 : index
    %c0_25 = arith.constant 0 : index
    %23 = vector.load %arg1[%c7, %c0_24, %c0_25] : memref<16x8x8xf32, #tpu.memory_space<vmem>>, vector<1x8x8xf32>
    %24 = vector.shape_cast %23 : vector<1x8x8xf32> to vector<8x8xf32>
    %c56 = arith.constant 56 : index
    %c56_26 = arith.constant 56 : index
    %25 = vector.load %arg5[%c56, %c56_26] : memref<128x128xf32, #tpu.memory_space<vmem>>, vector<8x8xf32>
    tpu.vector_store %arg5[%c56, %c56_26], %24 {strides = array<i32>} : memref<128x128xf32, #tpu.memory_space<vmem>>, vector<8x8xf32>,
    %c8_27 = arith.constant 8 : index
    %c0_28 = arith.constant 0 : index
    %c0_29 = arith.constant 0 : index
    %26 = vector.load %arg1[%c8_27, %c0_28, %c0_29] : memref<16x8x8xf32, #tpu.memory_space<vmem>>, vector<1x8x8xf32>
    %27 = vector.shape_cast %26 : vector<1x8x8xf32> to vector<8x8xf32>
    %c64 = arith.constant 64 : index
    %c64_30 = arith.constant 64 : index
    %28 = vector.load %arg5[%c64, %c64_30] : memref<128x128xf32, #tpu.memory_space<vmem>>, vector<8x8xf32>
    tpu.vector_store %arg5[%c64, %c64_30], %27 {strides = array<i32>} : memref<128x128xf32, #tpu.memory_space<vmem>>, vector<8x8xf32>,
    %c9 = arith.constant 9 : index
    %c0_31 = arith.constant 0 : index
    %c0_32 = arith.constant 0 : index
    %29 = vector.load %arg1[%c9, %c0_31, %c0_32] : memref<16x8x8xf32, #tpu.memory_space<vmem>>, vector<1x8x8xf32>
    %30 = vector.shape_cast %29 : vector<1x8x8xf32> to vector<8x8xf32>
    %c72 = arith.constant 72 : index
    %c72_33 = arith.constant 72 : index
    %31 = vector.load %arg5[%c72, %c72_33] : memref<128x128xf32, #tpu.memory_space<vmem>>, vector<8x8xf32>
    tpu.vector_store %arg5[%c72, %c72_33], %30 {strides = array<i32>} : memref<128x128xf32, #tpu.memory_space<vmem>>, vector<8x8xf32>,
    %c10 = arith.constant 10 : index
    %c0_34 = arith.constant 0 : index
    %c0_35 = arith.constant 0 : index
    %32 = vector.load %arg1[%c10, %c0_34, %c0_35] : memref<16x8x8xf32, #tpu.memory_space<vmem>>, vector<1x8x8xf32>
    %33 = vector.shape_cast %32 : vector<1x8x8xf32> to vector<8x8xf32>
    %c80 = arith.constant 80 : index
    %c80_36 = arith.constant 80 : index
    %34 = vector.load %arg5[%c80, %c80_36] : memref<128x128xf32, #tpu.memory_space<vmem>>, vector<8x8xf32>
    tpu.vector_store %arg5[%c80, %c80_36], %33 {strides = array<i32>} : memref<128x128xf32, #tpu.memory_space<vmem>>, vector<8x8xf32>,
    %c11 = arith.constant 11 : index
    %c0_37 = arith.constant 0 : index
    %c0_38 = arith.constant 0 : index
    %35 = vector.load %arg1[%c11, %c0_37, %c0_38] : memref<16x8x8xf32, #tpu.memory_space<vmem>>, vector<1x8x8xf32>
    %36 = vector.shape_cast %35 : vector<1x8x8xf32> to vector<8x8xf32>
    %c88 = arith.constant 88 : index
    %c88_39 = arith.constant 88 : index
    %37 = vector.load %arg5[%c88, %c88_39] : memref<128x128xf32, #tpu.memory_space<vmem>>, vector<8x8xf32>
    tpu.vector_store %arg5[%c88, %c88_39], %36 {strides = array<i32>} : memref<128x128xf32, #tpu.memory_space<vmem>>, vector<8x8xf32>,
    %c12 = arith.constant 12 : index
    %c0_40 = arith.constant 0 : index
    %c0_41 = arith.constant 0 : index
    %38 = vector.load %arg1[%c12, %c0_40, %c0_41] : memref<16x8x8xf32, #tpu.memory_space<vmem>>, vector<1x8x8xf32>
    %39 = vector.shape_cast %38 : vector<1x8x8xf32> to vector<8x8xf32>
    %c96 = arith.constant 96 : index
    %c96_42 = arith.constant 96 : index
    %40 = vector.load %arg5[%c96, %c96_42] : memref<128x128xf32, #tpu.memory_space<vmem>>, vector<8x8xf32>
    tpu.vector_store %arg5[%c96, %c96_42], %39 {strides = array<i32>} : memref<128x128xf32, #tpu.memory_space<vmem>>, vector<8x8xf32>,
    %c13 = arith.constant 13 : index
    %c0_43 = arith.constant 0 : index
    %c0_44 = arith.constant 0 : index
    %41 = vector.load %arg1[%c13, %c0_43, %c0_44] : memref<16x8x8xf32, #tpu.memory_space<vmem>>, vector<1x8x8xf32>
    %42 = vector.shape_cast %41 : vector<1x8x8xf32> to vector<8x8xf32>
    %c104 = arith.constant 104 : index
    %c104_45 = arith.constant 104 : index
    %43 = vector.load %arg5[%c104, %c104_45] : memref<128x128xf32, #tpu.memory_space<vmem>>, vector<8x8xf32>
    tpu.vector_store %arg5[%c104, %c104_45], %42 {strides = array<i32>} : memref<128x128xf32, #tpu.memory_space<vmem>>, vector<8x8xf32>,
    %c14 = arith.constant 14 : index
    %c0_46 = arith.constant 0 : index
    %c0_47 = arith.constant 0 : index
    %44 = vector.load %arg1[%c14, %c0_46, %c0_47] : memref<16x8x8xf32, #tpu.memory_space<vmem>>, vector<1x8x8xf32>
    %45 = vector.shape_cast %44 : vector<1x8x8xf32> to vector<8x8xf32>
    %c112 = arith.constant 112 : index
    %c112_48 = arith.constant 112 : index
    %46 = vector.load %arg5[%c112, %c112_48] : memref<128x128xf32, #tpu.memory_space<vmem>>, vector<8x8xf32>
    tpu.vector_store %arg5[%c112, %c112_48], %45 {strides = array<i32>} : memref<128x128xf32, #tpu.memory_space<vmem>>, vector<8x8xf32>,
    %c15 = arith.constant 15 : index
    %c0_49 = arith.constant 0 : index
    %c0_50 = arith.constant 0 : index
    %47 = vector.load %arg1[%c15, %c0_49, %c0_50] : memref<16x8x8xf32, #tpu.memory_space<vmem>>, vector<1x8x8xf32>
    %48 = vector.shape_cast %47 : vector<1x8x8xf32> to vector<8x8xf32>
    %c120 = arith.constant 120 : index
    %c120_51 = arith.constant 120 : index
    %49 = vector.load %arg5[%c120, %c120_51] : memref<128x128xf32, #tpu.memory_space<vmem>>, vector<8x8xf32>
    tpu.vector_store %arg5[%c120, %c120_51], %48 {strides = array<i32>} : memref<128x128xf32, #tpu.memory_space<vmem>>, vector<8x8xf32>,
    %c0_52 = arith.constant 0 : index
    %c0_53 = arith.constant 0 : index
    %50 = vector.load %arg5[%c0_52, %c0_53] : memref<128x128xf32, #tpu.memory_space<vmem>>, vector<128x128xf32>
    %c0_54 = arith.constant 0 : index
    %c0_55 = arith.constant 0 : index
    %51 = vector.load %arg3[%c0_54, %c0_55] : memref<33x128xf32, #tpu.memory_space<vmem>>, vector<32x32xf32>
    %c0_56 = arith.constant 0 : index
    %c32_57 = arith.constant 32 : index
    %52 = vector.load %arg3[%c0_56, %c32_57] : memref<33x128xf32, #tpu.memory_space<vmem>>, vector<32x1xf32>
    %c0_58 = arith.constant 0 : index
    %c33 = arith.constant 33 : index
    %53 = vector.load %arg3[%c0_58, %c33] : memref<33x128xf32, #tpu.memory_space<vmem>>, vector<32x1xf32>
    %c0_59 = arith.constant 0 : index
    %c34 = arith.constant 34 : index
    %54 = vector.load %arg3[%c0_59, %c34] : memref<33x128xf32, #tpu.memory_space<vmem>>, vector<32x1xf32>
    %c0_60 = arith.constant 0 : index
    %c35 = arith.constant 35 : index
    %55 = vector.load %arg3[%c0_60, %c35] : memref<33x128xf32, #tpu.memory_space<vmem>>, vector<32x1xf32>
    %c0_61 = arith.constant 0 : index
    %c36 = arith.constant 36 : index
    %56 = vector.load %arg3[%c0_61, %c36] : memref<33x128xf32, #tpu.memory_space<vmem>>, vector<32x1xf32>
    %c0_62 = arith.constant 0 : index
    %c37 = arith.constant 37 : index
    %57 = vector.load %arg3[%c0_62, %c37] : memref<33x128xf32, #tpu.memory_space<vmem>>, vector<1x1xf32>
    %c32_63 = arith.constant 32 : index
    %c0_64 = arith.constant 0 : index
    %58 = vector.load %arg3[%c32_63, %c0_64] : memref<33x128xf32, #tpu.memory_space<vmem>>, vector<1x128xf32>
    %c0_65 = arith.constant 0 : index
    %c0_66 = arith.constant 0 : index
    %c0_67 = arith.constant 0 : index
    %59 = vector.load %arg2[%c0_65, %c0_66, %c0_67] : memref<1x2x128xf32, #tpu.memory_space<vmem>>, vector<1x1x128xf32>
    %60 = vector.shape_cast %59 : vector<1x1x128xf32> to vector<1x128xf32>
    %c0_68 = arith.constant 0 : index
    %c1_69 = arith.constant 1 : index
    %c0_70 = arith.constant 0 : index
    %61 = vector.load %arg2[%c0_68, %c1_69, %c0_70] : memref<1x2x128xf32, #tpu.memory_space<vmem>>, vector<1x1x128xf32>
    %62 = vector.shape_cast %61 : vector<1x1x128xf32> to vector<1x128xf32>
    %63 = vector.broadcast %52 : vector<32x1xf32> to vector<32x128xf32>
    %64 = vector.broadcast %60 : vector<1x128xf32> to vector<32x128xf32>
    %65 = arith.mulf %63, %64 : vector<32x128xf32>
    %66 = vector.broadcast %53 : vector<32x1xf32> to vector<32x128xf32>
    %67 = vector.broadcast %62 : vector<1x128xf32> to vector<32x128xf32>
    %68 = arith.mulf %66, %67 : vector<32x128xf32>
    %69 = arith.addf %65, %68 : vector<32x128xf32>
    %cst_71 = arith.constant dense<0.000000e+00> : vector<32x128xf32>
    %70 = tpu.matmul %69, %50, %cst_71 {dimension_numbers = #tpu.dot_dimension_numbers<[1], [1], [0], [0], [0, 0, 1, 0], [], []>} : vector<32x128xf32>, vector<128x128xf32>, vector<32x128xf32> -> vector<32x128xf32>
    %71 = vector.broadcast %54 : vector<32x1xf32> to vector<32x128xf32>
    %72 = arith.addf %70, %71 : vector<32x128xf32>
    %cst_72 = arith.constant 0.000000e+00 : f32
    %73 = vector.broadcast %cst_72 : f32 to vector<32x128xf32>
    %74 = arith.maximumf %72, %73 : vector<32x128xf32>
    %cst_73 = arith.constant dense<0.000000e+00> : vector<32x128xf32>
    %75 = tpu.matmul %51, %74, %cst_73 {dimension_numbers = #tpu.dot_dimension_numbers<[1], [0], [0], [1], [0, 0, 1, 1], [], []>} : vector<32x32xf32>, vector<32x128xf32>, vector<32x128xf32> -> vector<32x128xf32>
    %cst_74 = arith.constant dense<0.000000e+00> : vector<32x128xf32>
    %76 = tpu.matmul %75, %50, %cst_74 {dimension_numbers = #tpu.dot_dimension_numbers<[1], [1], [0], [0], [0, 0, 1, 0], [], []>} : vector<32x128xf32>, vector<128x128xf32>, vector<32x128xf32> -> vector<32x128xf32>
    %77 = vector.broadcast %55 : vector<32x1xf32> to vector<32x128xf32>
    %78 = arith.addf %76, %77 : vector<32x128xf32>
    %cst_75 = arith.constant 0.000000e+00 : f32
    %79 = vector.broadcast %cst_75 : f32 to vector<32x128xf32>
    %80 = arith.maximumf %78, %79 : vector<32x128xf32>
    %81 = vector.broadcast %56 : vector<32x1xf32> to vector<32x128xf32>
    %82 = arith.mulf %80, %81 : vector<32x128xf32>
    %cst_76 = arith.constant dense<0.000000e+00> : vector<128xf32>
    %83 = vector.multi_reduction <add>, %82, %cst_76 [0] : vector<32x128xf32> to vector<128xf32>
    %84 = vector.shape_cast %83 : vector<128xf32> to vector<1x128xf32>
    %85 = vector.broadcast %57 : vector<1x1xf32> to vector<1x128xf32>
    %86 = arith.addf %84, %85 : vector<1x128xf32>
    %87 = arith.mulf %86, %58 : vector<1x128xf32>
    %c0_77 = arith.constant 0 : index
    %c0_78 = arith.constant 0 : index
    %c0_79 = arith.constant 0 : index
    %88 = vector.load %arg4[%c0_77, %c0_78, %c0_79] : memref<1x1x128xf32, #tpu.memory_space<vmem>>, vector<1x1x128xf32>
    %89 = vector.shape_cast %88 : vector<1x1x128xf32> to vector<1x128xf32>
    %90 = vector.shape_cast %87 : vector<1x128xf32> to vector<1x1x128xf32>
    tpu.vector_store %arg4[%c0_77, %c0_78, %c0_79], %90 {strides = array<i32>} : memref<1x1x128xf32, #tpu.memory_space<vmem>>, vector<1x1x128xf32>,
    return
  }
  func.func @transform_0(%arg0: i32) -> (i32, i32, i32) {
    %c0_i32 = arith.constant 0 : i32
    %c0_i32_0 = arith.constant 0 : i32
    %c0_i32_1 = arith.constant 0 : i32
    return %arg0, %c0_i32, %c0_i32_0 : i32, i32, i32
  }
  func.func @transform_1(%arg0: i32) -> (i32, i32, i32) {
    %c0_i32 = arith.constant 0 : i32
    %c0_i32_0 = arith.constant 0 : i32
    %c0_i32_1 = arith.constant 0 : i32
    return %arg0, %c0_i32, %c0_i32_0 : i32, i32, i32
  }
  func.func @transform_2(%arg0: i32) -> (i32, i32) {
    %c0_i32 = arith.constant 0 : i32
    %c0_i32_0 = arith.constant 0 : i32
    %c0_i32_1 = arith.constant 0 : i32
    return %c0_i32, %c0_i32_0 : i32, i32
  }
  func.func @transform_3(%arg0: i32) -> (i32, i32, i32) {
    %c0_i32 = arith.constant 0 : i32
    %c0_i32_0 = arith.constant 0 : i32
    %c0_i32_1 = arith.constant 0 : i32
    return %arg0, %c0_i32, %c0_i32_0 : i32, i32, i32
  }
}

</mosaic_0001>

<llo_original>
// kernel: tpu_custom_call.1
$region0: #{tpu_custom_call.1}
  #allocation0 [shape = 'u32[]', space=smem, size = 0x4, offset = 0x4, fixed_abs, tag = 'smem constant byte address 0x4 - core index']
  #allocation1 [shape = 'u32[144,128]{1,0:T(1,128)}', space=vmem, size = 0x12000, scoped, tag = 'internal scratch']
  #allocation2 [shape = 'f32[128,128]{1,0:T(8,128)}', space=vmem, size = 0x10000, scoped, tag = 'scratch operand']
  %s0 = inlined_call_operand.vmem [shape: f32[32,8,8], index: 0, kind: input, shape index: {}]
  %s1 = inlined_call_operand.vmem [shape: f32[2,2,128], index: 1, kind: input, shape index: {}]
  %s2 = inlined_call_operand.vmem [shape: f32[33,128], index: 2, kind: input, shape index: {}]
  %s3 = inlined_call_operand.hbm [shape: f32[2,1,128], index: 3, kind: output, shape index: {}]
  %s4 = sld [smem:[#allocation0]]
  $region45: #{tpu_custom_call.1} parent=0
    _
  %s6 = ssub.s32 1, %s4
  %s7 = scalar_select 0, %s6, %s4
  $region1: #{tpu_custom_call.1} parent=0
    #allocation3 [shape = 'u8[1024]{0}', space=vmem, size = 0x400, scoped, tag = 'output window, operand 0']
    #allocation4 [shape = 's32[2]{0}', space=sflag, size = 0x8, scoped, tag = 'scoped memory for tpu_custom_call.1']
    %8 = vsyncpa [#allocation4], 0
    %s9 = scalar_lea.sflag [#allocation4], 1
    %10 = vsyncpa %s9, 0
    loop: start=0, step=1, limit=4
    $region2: #{tpu_custom_call.1} parent=1 // loop_pre_header
      _
    $region3: #{tpu_custom_call.1} parent=1 // loop_header
      %s12 = sphi 0, %s16
      %p13 = scmp.ge.s32.totalorder %s12, 4
      %s22 = sphi 0, %s24
      %s25 = sphi 0, %s22
      %s26 = sphi 0, %s25
      %s42 = sphi 0, %s26
      %s48 = sphi 0, %s50
      %s51 = sphi 0, %s48
      %s52 = sphi 0, %s51
      %s68 = sphi 0, %s52
      %s72 = sphi 0, %s72
      %s74 = sphi 0, %s72
      %s75 = sphi 0, %s74
      %s89 = sphi 0, %s75
      %s95 = sphi 0, %s97
      %s98 = sphi 0, %s95
      %s99 = sphi 0, %s98
      %s115 = sphi 0, %s99
    $region4: #{tpu_custom_call.1} parent=1 // loop_header_branch
      %15 = sbr.rel (%p13) target = $region8
    $region5: #{tpu_custom_call.1} parent=1 // loop_body
      %s17 = ssub.s32 %s12, 1
      %s18 = ssub.s32 %s12, 2
      %s19 = sadd.s32 %s12, 1
      %s20 = ssub.s32 %s12, %s19
      %p21 = scmp.eq.s32.totalorder %s20, 0
      %s23 = sadd.s32 %s22, 1
      %s24 = scalar_select %p21, %s22, %s23
      %p27 = pneg %p21
      %p28 = scmp.eq.s32.totalorder %s12, 1
      %p29 = por %p27, %p28
      %p30 = scmp.ne.s32.totalorder %s22, %s25
      %p31 = scmp.eq.s32.totalorder %s12, 0
      %p32 = por %p30, %p31
      %p33 = scmp.ne.s32.totalorder %s22, %s25
      %p34 = scmp.eq.s32.totalorder %s17, 1
      %p35 = por %p33, %p34
      %p36 = scmp.ne.s32.totalorder %s25, %s26
      %p37 = scmp.eq.s32.totalorder %s17, 0
      %p38 = por %p36, %p37
      %p39 = scmp.ne.s32.totalorder %s25, %s26
      %p40 = scmp.eq.s32.totalorder %s18, 1
      %p41 = por %p39, %p40
      %p43 = scmp.ne.s32.totalorder %s26, %s42
      %p44 = scmp.eq.s32.totalorder %s18, 0
      %p45 = por %p43, %p44
      %s46 = ssub.s32 %s12, %s19
      %p47 = scmp.eq.s32.totalorder %s46, 0
      %s49 = sadd.s32 %s48, 1
      %s50 = scalar_select %p47, %s48, %s49
      %p53 = pneg %p47
      %p54 = scmp.eq.s32.totalorder %s12, 1
      %p55 = por %p53, %p54
      %p56 = scmp.ne.s32.totalorder %s48, %s51
      %p57 = scmp.eq.s32.totalorder %s12, 0
      %p58 = por %p56, %p57
      %p59 = scmp.ne.s32.totalorder %s48, %s51
      %p60 = scmp.eq.s32.totalorder %s17, 1
      %p61 = por %p59, %p60
      %p62 = scmp.ne.s32.totalorder %s51, %s52
      %p63 = scmp.eq.s32.totalorder %s17, 0
      %p64 = por %p62, %p63
      %p65 = scmp.ne.s32.totalorder %s51, %s52
      %p66 = scmp.eq.s32.totalorder %s18, 1
      %p67 = por %p65, %p66
      %p69 = scmp.ne.s32.totalorder %s52, %s68
      %p70 = scmp.eq.s32.totalorder %s18, 0
      %p71 = por %p69, %p70
      %s73 = sadd.s32 %s72, 1
      %p76 = scmp.eq.s32.totalorder %s12, 1
      %p77 = scmp.ne.s32.totalorder %s72, %s74
      %p78 = scmp.eq.s32.totalorder %s12, 0
      %p79 = por %p77, %p78
      %p80 = scmp.ne.s32.totalorder %s72, %s74
      %p81 = scmp.eq.s32.totalorder %s17, 1
      %p82 = por %p80, %p81
      %p83 = scmp.ne.s32.totalorder %s74, %s75
      %p84 = scmp.eq.s32.totalorder %s17, 0
      %p85 = por %p83, %p84
      %p86 = scmp.ne.s32.totalorder %s74, %s75
      %p87 = scmp.eq.s32.totalorder %s18, 1
      %p88 = por %p86, %p87
      %p90 = scmp.ne.s32.totalorder %s75, %s89
      %p91 = scmp.eq.s32.totalorder %s18, 0
      %p92 = por %p90, %p91
      %s93 = ssub.s32 %s12, %s19
      %p94 = scmp.eq.s32.totalorder %s93, 0
      %s96 = sadd.s32 %s95, 1
      %s97 = scalar_select %p94, %s95, %s96
      %p100 = pneg %p94
      %p101 = scmp.eq.s32.totalorder %s12, 1
      %p102 = por %p100, %p101
      %p103 = scmp.ne.s32.totalorder %s95, %s98
      %p104 = scmp.eq.s32.totalorder %s12, 0
      %p105 = por %p103, %p104
      %p106 = scmp.ne.s32.totalorder %s95, %s98
      %p107 = scmp.eq.s32.totalorder %s17, 1
      %p108 = por %p106, %p107
      %p109 = scmp.ne.s32.totalorder %s98, %s99
      %p110 = scmp.eq.s32.totalorder %s17, 0
      %p111 = por %p109, %p110
      %p112 = scmp.ne.s32.totalorder %s98, %s99
      %p113 = scmp.eq.s32.totalorder %s18, 1
      %p114 = por %p112, %p113
      %p116 = scmp.ne.s32.totalorder %s99, %s115
      %p117 = scmp.eq.s32.totalorder %s18, 0
      %p118 = por %p116, %p117
      %p119 = scmp.le.s32.totalorder 1, %s12
      %p120 = scmp.lt.s32.totalorder %s12, 3
      %p121 = pnand %p119, %p120
      %p122 = pneg %p121
      // Predicated region
      $region9: #{tpu_custom_call.1} parent=5 // pred_check
        _
      $region10: #{tpu_custom_call.1} parent=5 // pred_check_branch
        %124 = sbr.rel (%p121) target = $region12
      $region11: #{tpu_custom_call.1} parent=5 // pred_region
        %s125 = ssub.s32 %s12, 1
        // Predicated region
        $region13: #{tpu_custom_call.1} parent=11 // pred_check
          %p126 = pneg %p85
        $region14: #{tpu_custom_call.1} parent=11 // pred_check_branch
          %128 = sbr.rel (%p126) target = $region16
        $region15: #{tpu_custom_call.1} parent=11 // pred_region
          _
        $region16: #{tpu_custom_call.1} parent=11 // pred_fallthru
          _
      $region12: #{tpu_custom_call.1} parent=5 // pred_fallthru
        _
      %p129 = scmp.lt.s32.totalorder %s12, 2
      // Predicated region
      $region17: #{tpu_custom_call.1} parent=5 // pred_check
        %p130 = pneg %p129
      $region18: #{tpu_custom_call.1} parent=5 // pred_check_branch
        %132 = sbr.rel (%p130) target = $region20
      $region19: #{tpu_custom_call.1} parent=5 // pred_region
        // Predicated region
        $region21: #{tpu_custom_call.1} parent=19 // pred_check
          %p133 = pneg %p32
        $region22: #{tpu_custom_call.1} parent=19 // pred_check_branch
          %135 = sbr.rel (%p133) target = $region24
        $region23: #{tpu_custom_call.1} parent=19 // pred_region
          %s136 = smul.u32 16, %s12
          %p137 = scmp.lt.s32.totalorder %s136, 31
          %s138 = scalar_select %p137, %s136, 31
          %s139 = smul.addr %s138, 8
          %s140 = scalar_lea.vmem %s0, %s139
          %s141 = smul.u32 16, %s12
        $region24: #{tpu_custom_call.1} parent=19 // pred_fallthru
          _
        // Predicated region
        $region25: #{tpu_custom_call.1} parent=19 // pred_check
          %p142 = pneg %p58
        $region26: #{tpu_custom_call.1} parent=19 // pred_check_branch
          %144 = sbr.rel (%p142) target = $region28
        $region27: #{tpu_custom_call.1} parent=19 // pred_region
          %p145 = scmp.lt.s32.totalorder %s12, 1
          %s146 = scalar_select %p145, %s12, 1
          %s147 = smul.addr %s146, 2
          %s148 = scalar_lea.vmem %s1, %s147
        $region28: #{tpu_custom_call.1} parent=19 // pred_fallthru
          _
      $region20: #{tpu_custom_call.1} parent=5 // pred_fallthru
        _
      %p149 = scmp.le.s32.totalorder 1, %s12
      %p150 = scmp.lt.s32.totalorder %s12, 3
      %p151 = pnand %p149, %p150
      %p152 = pneg %p151
      // Predicated region
      $region29: #{tpu_custom_call.1} parent=5 // pred_check
        _
      $region30: #{tpu_custom_call.1} parent=5 // pred_check_branch
        %154 = sbr.rel (%p151) target = $region32
      $region31: #{tpu_custom_call.1} parent=5 // pred_region
        %s155 = ssub.s32 %s12, 1
        %s156 = smul.u32 16, %s17
        %p157 = scmp.lt.s32.totalorder %s156, 31
        %s158 = scalar_select %p157, %s156, 31
        %s159 = smul.addr %s158, 8
        %s160 = scalar_lea.vmem %s0, %s159
        %p161 = pneg %p38
        %p162 = pneg %p35
        %p163 = scmp.lt.s32.totalorder %s17, 1
        %s164 = scalar_select %p163, %s17, 1
        %s165 = smul.addr %s164, 2
        %s166 = scalar_lea.vmem %s1, %s165
        %p167 = pneg %p64
        %p168 = pneg %p61
        %p169 = pneg %p85
        %p170 = pneg %p82
        %p171 = pneg %p111
        %p172 = pneg %p108
        %s173 = sand.u32 %s98, 1
        %s174 = scalar_lea.sflag [#allocation4], %s173
        %s175 = sand.u32 %s98, 1
        %s176 = scalar_lea.vmem [#allocation3], %s175
        %s177 = smul.u32 16, %s17
        %p178 = scmp.lt.s32.totalorder %s177, 31
        %s179 = scalar_select %p178, %s177, 31
        %s180 = smul.addr %s179, 8
        %s181 = scalar_lea.vmem %s0, %s180
        %s182 = smul.u32 16, %s17
        %p183 = scmp.lt.s32.totalorder %s17, 1
        %s184 = scalar_select %p183, %s17, 1
        %s185 = smul.addr %s184, 2
        %s186 = scalar_lea.vmem %s1, %s185
        %187 = vst [vmem:[#allocation2] sm:$0xff] 0.0
        %188 = vst [vmem:[#allocation2 + $0x8] sm:$0xff] 0.0
        %189 = vst [vmem:[#allocation2 + $0x10] sm:$0xff] 0.0
        %190 = vst [vmem:[#allocation2 + $0x18] sm:$0xff] 0.0
        %191 = vst [vmem:[#allocation2 + $0x20] sm:$0xff] 0.0
        %192 = vst [vmem:[#allocation2 + $0x28] sm:$0xff] 0.0
        %193 = vst [vmem:[#allocation2 + $0x30] sm:$0xff] 0.0
        %194 = vst [vmem:[#allocation2 + $0x38] sm:$0xff] 0.0
        %195 = vst [vmem:[#allocation2 + $0x40] sm:$0xff] 0.0
        %196 = vst [vmem:[#allocation2 + $0x48] sm:$0xff] 0.0
        %197 = vst [vmem:[#allocation2 + $0x50] sm:$0xff] 0.0
        %198 = vst [vmem:[#allocation2 + $0x58] sm:$0xff] 0.0
        %199 = vst [vmem:[#allocation2 + $0x60] sm:$0xff] 0.0
        %200 = vst [vmem:[#allocation2 + $0x68] sm:$0xff] 0.0
        %201 = vst [vmem:[#allocation2 + $0x70] sm:$0xff] 0.0
        %202 = vst [vmem:[#allocation2 + $0x78] sm:$0xff] 0.0
        %v203 = vld [vmem:[%s181] sm:$0xff]
        %vm204 = vcmask 64512
        %205 = vst.msk [vmem:[#allocation2] sm:$0xff] %vm204, %v203
        %s206 = scalar_lea.vmem %s181, 8
        %v207 = vld [vmem:[%s206] sm:$0xff]
        %209 = vrot.lane.b32.xlu0 %v207, 8
        %v210 = vpop.permute.xlu0 %209
        %vm212 = vcmask 130112
        %213 = vst.msk [vmem:[#allocation2 + $0x8] sm:$0xff] %vm212, %v210
        %s214 = scalar_lea.vmem %s181, 16
        %v215 = vld [vmem:[%s214] sm:$0xff]
        %217 = vrot.lane.b32.xlu0 %v215, 16
        %v218 = vpop.permute.xlu0 %217
        %vm220 = vcmask 195712
        %221 = vst.msk [vmem:[#allocation2 + $0x10] sm:$0xff] %vm220, %v218
        %s222 = scalar_lea.vmem %s181, 24
        %v223 = vld [vmem:[%s222] sm:$0xff]
        %225 = vrot.lane.b32.xlu0 %v223, 24
        %v226 = vpop.permute.xlu0 %225
        %vm228 = vcmask 261312
        %229 = vst.msk [vmem:[#allocation2 + $0x18] sm:$0xff] %vm228, %v226
        %s230 = scalar_lea.vmem %s181, 32
        %v231 = vld [vmem:[%s230] sm:$0xff]
        %233 = vrot.lane.b32.xlu0 %v231, 32
        %v234 = vpop.permute.xlu0 %233
        %vm236 = vcmask 326912
        %237 = vst.msk [vmem:[#allocation2 + $0x20] sm:$0xff] %vm236, %v234
        %s238 = scalar_lea.vmem %s181, 40
        %v239 = vld [vmem:[%s238] sm:$0xff]
        %241 = vrot.lane.b32.xlu0 %v239, 40
        %v242 = vpop.permute.xlu0 %241
        %vm244 = vcmask 392512
        %245 = vst.msk [vmem:[#allocation2 + $0x28] sm:$0xff] %vm244, %v242
        %s246 = scalar_lea.vmem %s181, 48
        %v247 = vld [vmem:[%s246] sm:$0xff]
        %249 = vrot.lane.b32.xlu0 %v247, 48
        %v250 = vpop.permute.xlu0 %249
        %vm252 = vcmask 458112
        %253 = vst.msk [vmem:[#allocation2 + $0x30] sm:$0xff] %vm252, %v250
        %s254 = scalar_lea.vmem %s181, 56
        %v255 = vld [vmem:[%s254] sm:$0xff]
        %257 = vrot.lane.b32.xlu0 %v255, 56
        %v258 = vpop.permute.xlu0 %257
        %vm260 = vcmask 523712
        %261 = vst.msk [vmem:[#allocation2 + $0x38] sm:$0xff] %vm260, %v258
        %s262 = scalar_lea.vmem %s181, 64
        %v263 = vld [vmem:[%s262] sm:$0xff]
        %265 = vrot.lane.b32.xlu0 %v263, 64
        %v266 = vpop.permute.xlu0 %265
        %vm268 = vcmask 589312
        %269 = vst.msk [vmem:[#allocation2 + $0x40] sm:$0xff] %vm268, %v266
        %s270 = scalar_lea.vmem %s181, 72
        %v271 = vld [vmem:[%s270] sm:$0xff]
        %273 = vrot.lane.b32.xlu0 %v271, 72
        %v274 = vpop.permute.xlu0 %273
        %vm276 = vcmask 654912
        %277 = vst.msk [vmem:[#allocation2 + $0x48] sm:$0xff] %vm276, %v274
        %s278 = scalar_lea.vmem %s181, 80
        %v279 = vld [vmem:[%s278] sm:$0xff]
        %281 = vrot.lane.b32.xlu0 %v279, 80
        %v282 = vpop.permute.xlu0 %281
        %vm284 = vcmask 720512
        %285 = vst.msk [vmem:[#allocation2 + $0x50] sm:$0xff] %vm284, %v282
        %s286 = scalar_lea.vmem %s181, 88
        %v287 = vld [vmem:[%s286] sm:$0xff]
        %289 = vrot.lane.b32.xlu0 %v287, 88
        %v290 = vpop.permute.xlu0 %289
        %vm292 = vcmask 786112
        %293 = vst.msk [vmem:[#allocation2 + $0x58] sm:$0xff] %vm292, %v290
        %s294 = scalar_lea.vmem %s181, 96
        %v295 = vld [vmem:[%s294] sm:$0xff]
        %297 = vrot.lane.b32.xlu0 %v295, 96
        %v298 = vpop.permute.xlu0 %297
        %vm300 = vcmask 851712
        %301 = vst.msk [vmem:[#allocation2 + $0x60] sm:$0xff] %vm300, %v298
        %s302 = scalar_lea.vmem %s181, 104
        %v303 = vld [vmem:[%s302] sm:$0xff]
        %305 = vrot.lane.b32.xlu0 %v303, 104
        %v306 = vpop.permute.xlu0 %305
        %vm308 = vcmask 917312
        %309 = vst.msk [vmem:[#allocation2 + $0x68] sm:$0xff] %vm308, %v306
        %s310 = scalar_lea.vmem %s181, 112
        %v311 = vld [vmem:[%s310] sm:$0xff]
        %313 = vrot.lane.b32.xlu0 %v311, 112
        %v314 = vpop.permute.xlu0 %313
        %vm316 = vcmask 982912
        %317 = vst.msk [vmem:[#allocation2 + $0x70] sm:$0xff] %vm316, %v314
        %s318 = scalar_lea.vmem %s181, 120
        %v319 = vld [vmem:[%s318] sm:$0xff]
        %321 = vrot.lane.b32.xlu0 %v319, 120
        %v322 = vpop.permute.xlu0 %321
        %vm324 = vcmask 1048512
        %325 = vst.msk [vmem:[#allocation2 + $0x78] sm:$0xff] %vm324, %v322
        %v326 = vld [vmem:[#allocation2] sm:$0xff]
        %v327 = vld [vmem:[#allocation2 + $0x8] sm:$0xff]
        %v328 = vld [vmem:[#allocation2 + $0x10] sm:$0xff]
        %v329 = vld [vmem:[#allocation2 + $0x18] sm:$0xff]
        %v330 = vld [vmem:[#allocation2 + $0x20] sm:$0xff]
        %v331 = vld [vmem:[#allocation2 + $0x28] sm:$0xff]
        %v332 = vld [vmem:[#allocation2 + $0x30] sm:$0xff]
        %v333 = vld [vmem:[#allocation2 + $0x38] sm:$0xff]
        %v334 = vld [vmem:[#allocation2 + $0x40] sm:$0xff]
        %v335 = vld [vmem:[#allocation2 + $0x48] sm:$0xff]
        %v336 = vld [vmem:[#allocation2 + $0x50] sm:$0xff]
        %v337 = vld [vmem:[#allocation2 + $0x58] sm:$0xff]
        %v338 = vld [vmem:[#allocation2 + $0x60] sm:$0xff]
        %v339 = vld [vmem:[#allocation2 + $0x68] sm:$0xff]
        %v340 = vld [vmem:[#allocation2 + $0x70] sm:$0xff]
        %v341 = vld [vmem:[#allocation2 + $0x78] sm:$0xff]
        %v342 = vld [vmem:[%s2] sm:$0xff]
        %v343 = vld [vmem:[%s2 + $0x8] sm:$0xff]
        %v344 = vld [vmem:[%s2 + $0x10] sm:$0xff]
        %v345 = vld [vmem:[%s2 + $0x18] sm:$0xff]
        %v346 = vld [vmem:[%s2] sm:$0x1]
        %v347 = vld [vmem:[%s2 + $0x20] sm:$0x1]
        %v348 = vld [vmem:[%s186] sm:$0x1]
        %v349 = vld [vmem:[%s186 + $0x1] sm:$0x1]
        %351 = vset.pattern.permute.xlu0 32
        %352 = vperm.xlu0 %351, %v342
        %v353 = vpop.permute.xlu0 %352
        %356 = vset.pattern.permute.xlu0 32
        %357 = vperm.xlu0 %356, %v343
        %v358 = vpop.permute.xlu0 %357
        %361 = vset.pattern.permute.xlu0 32
        %362 = vperm.xlu0 %361, %v344
        %v363 = vpop.permute.xlu0 %362
        %366 = vset.pattern.permute.xlu0 32
        %367 = vperm.xlu0 %366, %v345
        %v368 = vpop.permute.xlu0 %367
        %v370 = vlaneseq
        %v371 = vshrl.u32 %v370, 7
        %v372 = vsub.s32 0, %v371
        %v373 = vrot.slane %v348, %v372
        %v374 = vmul.f32 %v353, %v373
        %v375 = vmul.f32 %v358, %v373
        %v376 = vmul.f32 %v363, %v373
        %v377 = vmul.f32 %v368, %v373
        %378 = vset.pattern.permute.xlu0 33
        %379 = vperm.xlu0 %378, %v342
        %v380 = vpop.permute.xlu0 %379
        %382 = vset.pattern.permute.xlu0 33
        %383 = vperm.xlu0 %382, %v343
        %v384 = vpop.permute.xlu0 %383
        %386 = vset.pattern.permute.xlu0 33
        %387 = vperm.xlu0 %386, %v344
        %v388 = vpop.permute.xlu0 %387
        %390 = vset.pattern.permute.xlu0 33
        %391 = vperm.xlu0 %390, %v345
        %v392 = vpop.permute.xlu0 %391
        %v394 = vlaneseq
        %v395 = vshrl.u32 %v394, 7
        %v396 = vsub.s32 0, %v395
        %v397 = vrot.slane %v349, %v396
        %v398 = vmul.f32 %v380, %v397
        %v399 = vmul.f32 %v384, %v397
        %v400 = vmul.f32 %v388, %v397
        %v401 = vmul.f32 %v392, %v397
        %v402 = vadd.f32 %v374, %v398
        %v403 = vadd.f32 %v375, %v399
        %v404 = vadd.f32 %v376, %v400
        %v405 = vadd.f32 %v377, %v401
        %406 = vset.pattern.permute.xlu0 34
        %407 = vperm.xlu0 %406, %v342
        %v408 = vpop.permute.xlu0 %407
        %410 = vset.pattern.permute.xlu0 34
        %411 = vperm.xlu0 %410, %v343
        %v412 = vpop.permute.xlu0 %411
        %414 = vset.pattern.permute.xlu0 34
        %415 = vperm.xlu0 %414, %v344
        %v416 = vpop.permute.xlu0 %415
        %418 = vset.pattern.permute.xlu0 34
        %419 = vperm.xlu0 %418, %v345
        %v420 = vpop.permute.xlu0 %419
        %422 = vmatprep.subr.mxu0 0.0
        %423 = vmatpush1.xpose.msra.mxu0 %v341
        %424 = vmatprep.subr.mxu0 0.0
        %425 = vmatpush1.xpose.msra.mxu0 %v340
        %426 = vmatprep.subr.mxu0 0.0
        %427 = vmatpush1.xpose.msra.mxu0 %v339
        %428 = vmatprep.subr.mxu0 0.0
        %429 = vmatpush1.xpose.msra.mxu0 %v338
        %430 = vmatprep.subr.mxu0 0.0
        %431 = vmatpush1.xpose.msra.mxu0 %v337
        %432 = vmatprep.subr.mxu0 0.0
        %433 = vmatpush1.xpose.msra.mxu0 %v336
        %434 = vmatprep.subr.mxu0 0.0
        %435 = vmatpush1.xpose.msra.mxu0 %v335
        %436 = vmatprep.subr.mxu0 0.0
        %437 = vmatpush1.xpose.msra.mxu0 %v334
        %438 = vmatprep.subr.mxu0 0.0
        %439 = vmatpush1.xpose.msra.mxu0 %v333
        %440 = vmatprep.subr.mxu0 0.0
        %441 = vmatpush1.xpose.msra.mxu0 %v332
        %442 = vmatprep.subr.mxu0 0.0
        %443 = vmatpush1.xpose.msra.mxu0 %v331
        %444 = vmatprep.subr.mxu0 0.0
        %445 = vmatpush1.xpose.msra.mxu0 %v330
        %446 = vmatprep.subr.mxu0 0.0
        %447 = vmatpush1.xpose.msra.mxu0 %v329
        %448 = vmatprep.subr.mxu0 0.0
        %449 = vmatpush1.xpose.msra.mxu0 %v328
        %450 = vmatprep.subr.mxu0 0.0
        %451 = vmatpush1.xpose.msra.mxu0 %v327
        %452 = vmatprep.subr.mxu0 0.0
        %453 = vmatpush1.xpose.msra.mxu0 %v326
        %454 = vmatprep.subr.mxu0 0.0
        %455 = vmatpush2.xpose.msra.mxu0 0.0
        %456 = vmatprep.subr.mxu0 0.0
        %457 = vmatpush2.xpose.msra.mxu0 0.0
        %458 = vmatprep.subr.mxu0 0.0
        %459 = vmatpush2.xpose.msra.mxu0 0.0
        %460 = vmatprep.subr.mxu0 0.0
        %461 = vmatpush2.xpose.msra.mxu0 0.0
        %462 = vmatprep.subr.mxu0 0.0
        %463 = vmatpush2.xpose.msra.mxu0 0.0
        %464 = vmatprep.subr.mxu0 0.0
        %465 = vmatpush2.xpose.msra.mxu0 0.0
        %466 = vmatprep.subr.mxu0 0.0
        %467 = vmatpush2.xpose.msra.mxu0 0.0
        %468 = vmatprep.subr.mxu0 0.0
        %469 = vmatpush2.xpose.msra.mxu0 0.0
        %470 = vmatprep.subr.mxu0 0.0
        %471 = vmatpush2.xpose.msra.mxu0 0.0
        %472 = vmatprep.subr.mxu0 0.0
        %473 = vmatpush2.xpose.msra.mxu0 0.0
        %474 = vmatprep.subr.mxu0 0.0
        %475 = vmatpush2.xpose.msra.mxu0 0.0
        %476 = vmatprep.subr.mxu0 0.0
        %477 = vmatpush2.xpose.msra.mxu0 0.0
        %478 = vmatprep.subr.mxu0 0.0
        %479 = vmatpush2.xpose.msra.mxu0 0.0
        %480 = vmatprep.subr.mxu0 0.0
        %481 = vmatpush2.xpose.msra.mxu0 0.0
        %482 = vmatprep.subr.mxu0 0.0
        %483 = vmatpush2.xpose.msra.mxu0 0.0
        %484 = vmatprep.subr.mxu0 0.0
        %485 = vmatpush2.xpose.msra.mxu0 0.0
        %486 = vmatprep.mubr.f32.mxu0 0.0
        %487 = vmatmul.mubr.f32.gmra.mxu0 %v402
        %v488 = vpop.f32.mrf.mxu0
        %v489 = vadd.f32 %v408, %v488
        %v490 = vpop.f32.mrf.mxu0
        %491 = vmatprep.mubr.f32.mxu0 0.0
        %492 = vmatmul.mubr.f32.gmra.mxu0 %v403
        %v493 = vpop.f32.mrf.mxu0
        %v494 = vadd.f32 %v412, %v493
        %v495 = vpop.f32.mrf.mxu0
        %496 = vmatprep.mubr.f32.mxu0 0.0
        %497 = vmatmul.mubr.f32.gmra.mxu0 %v404
        %v498 = vpop.f32.mrf.mxu0
        %v499 = vadd.f32 %v416, %v498
        %v500 = vpop.f32.mrf.mxu0
        %501 = vmatprep.mubr.f32.mxu0 0.0
        %502 = vmatmul.mubr.f32.gmra.mxu0 %v405
        %v503 = vpop.f32.mrf.mxu0
        %v504 = vadd.f32 %v420, %v503
        %v505 = vpop.f32.mrf.mxu0
        %506 = vdwg.mxu0
        %v507 = vmax.f32 %v489, 0.0
        %v508 = vmax.f32 %v494, 0.0
        %v509 = vmax.f32 %v499, 0.0
        %v510 = vmax.f32 %v504, 0.0
        %vm511 = vcmask 261120
        %v512 = vsel %vm511, %v342, 0
        %v514 = vsel %vm511, %v343, 0
        %v516 = vsel %vm511, %v344, 0
        %v518 = vsel %vm511, %v345, 0
        %520 = vmatprep.subr.mxu0 0.0
        %521 = vmatpush1.msra.mxu0 0.0
        %522 = vmatprep.subr.mxu0 0.0
        %523 = vmatpush1.msra.mxu0 0.0
        %524 = vmatprep.subr.mxu0 0.0
        %525 = vmatpush1.msra.mxu0 0.0
        %526 = vmatprep.subr.mxu0 0.0
        %527 = vmatpush1.msra.mxu0 0.0
        %528 = vmatprep.subr.mxu0 0.0
        %529 = vmatpush1.msra.mxu0 0.0
        %530 = vmatprep.subr.mxu0 0.0
        %531 = vmatpush1.msra.mxu0 0.0
        %532 = vmatprep.subr.mxu0 0.0
        %533 = vmatpush1.msra.mxu0 0.0
        %534 = vmatprep.subr.mxu0 0.0
        %535 = vmatpush1.msra.mxu0 0.0
        %536 = vmatprep.subr.mxu0 0.0
        %537 = vmatpush1.msra.mxu0 0.0
        %538 = vmatprep.subr.mxu0 0.0
        %539 = vmatpush1.msra.mxu0 0.0
        %540 = vmatprep.subr.mxu0 0.0
        %541 = vmatpush1.msra.mxu0 0.0
        %542 = vmatprep.subr.mxu0 0.0
        %543 = vmatpush1.msra.mxu0 0.0
        %544 = vmatprep.subr.mxu0 0.0
        %545 = vmatpush1.msra.mxu0 %v510
        %546 = vmatprep.subr.mxu0 0.0
        %547 = vmatpush1.msra.mxu0 %v509
        %548 = vmatprep.subr.mxu0 0.0
        %549 = vmatpush1.msra.mxu0 %v508
        %550 = vmatprep.subr.mxu0 0.0
        %551 = vmatpush1.msra.mxu0 %v507
        %552 = vmatprep.subr.mxu0 0.0
        %553 = vmatpush2.msra.mxu0 0.0
        %554 = vmatprep.subr.mxu0 0.0
        %555 = vmatpush2.msra.mxu0 0.0
        %556 = vmatprep.subr.mxu0 0.0
        %557 = vmatpush2.msra.mxu0 0.0
        %558 = vmatprep.subr.mxu0 0.0
        %559 = vmatpush2.msra.mxu0 0.0
        %560 = vmatprep.subr.mxu0 0.0
        %561 = vmatpush2.msra.mxu0 0.0
        %562 = vmatprep.subr.mxu0 0.0
        %563 = vmatpush2.msra.mxu0 0.0
        %564 = vmatprep.subr.mxu0 0.0
        %565 = vmatpush2.msra.mxu0 0.0
        %566 = vmatprep.subr.mxu0 0.0
        %567 = vmatpush2.msra.mxu0 0.0
        %568 = vmatprep.subr.mxu0 0.0
        %569 = vmatpush2.msra.mxu0 0.0
        %570 = vmatprep.subr.mxu0 0.0
        %571 = vmatpush2.msra.mxu0 0.0
        %572 = vmatprep.subr.mxu0 0.0
        %573 = vmatpush2.msra.mxu0 0.0
        %574 = vmatprep.subr.mxu0 0.0
        %575 = vmatpush2.msra.mxu0 0.0
        %576 = vmatprep.subr.mxu0 0.0
        %577 = vmatpush2.msra.mxu0 0.0
        %578 = vmatprep.subr.mxu0 0.0
        %579 = vmatpush2.msra.mxu0 0.0
        %580 = vmatprep.subr.mxu0 0.0
        %581 = vmatpush2.msra.mxu0 0.0
        %582 = vmatprep.subr.mxu0 0.0
        %583 = vmatpush2.msra.mxu0 0.0
        %584 = vmatprep.mubr.f32.mxu0 0.0
        %585 = vmatmul.mubr.f32.gmra.mxu0 %v512
        %v586 = vpop.f32.mrf.mxu0
        %v587 = vadd.f32 0.0, %v586
        %v588 = vpop.f32.mrf.mxu0
        %589 = vmatprep.mubr.f32.mxu0 0.0
        %590 = vmatmul.mubr.f32.gmra.mxu0 %v514
        %v591 = vpop.f32.mrf.mxu0
        %v592 = vadd.f32 0.0, %v591
        %v593 = vpop.f32.mrf.mxu0
        %594 = vmatprep.mubr.f32.mxu0 0.0
        %595 = vmatmul.mubr.f32.gmra.mxu0 %v516
        %v596 = vpop.f32.mrf.mxu0
        %v597 = vadd.f32 0.0, %v596
        %v598 = vpop.f32.mrf.mxu0
        %599 = vmatprep.mubr.f32.mxu0 0.0
        %600 = vmatmul.mubr.f32.gmra.mxu0 %v518
        %v601 = vpop.f32.mrf.mxu0
        %v602 = vadd.f32 0.0, %v601
        %v603 = vpop.f32.mrf.mxu0
        %604 = vdwg.mxu0
        %605 = vset.pattern.permute.xlu0 35
        %606 = vperm.xlu0 %605, %v342
        %v607 = vpop.permute.xlu0 %606
        %609 = vset.pattern.permute.xlu0 35
        %610 = vperm.xlu0 %609, %v343
        %v611 = vpop.permute.xlu0 %610
        %613 = vset.pattern.permute.xlu0 35
        %614 = vperm.xlu0 %613, %v344
        %v615 = vpop.permute.xlu0 %614
        %617 = vset.pattern.permute.xlu0 35
        %618 = vperm.xlu0 %617, %v345
        %v619 = vpop.permute.xlu0 %618
        %621 = vmatprep.subr.mxu0 0.0
        %622 = vmatpush1.xpose.msra.mxu0 %v341
        %623 = vmatprep.subr.mxu0 0.0
        %624 = vmatpush1.xpose.msra.mxu0 %v340
        %625 = vmatprep.subr.mxu0 0.0
        %626 = vmatpush1.xpose.msra.mxu0 %v339
        %627 = vmatprep.subr.mxu0 0.0
        %628 = vmatpush1.xpose.msra.mxu0 %v338
        %629 = vmatprep.subr.mxu0 0.0
        %630 = vmatpush1.xpose.msra.mxu0 %v337
        %631 = vmatprep.subr.mxu0 0.0
        %632 = vmatpush1.xpose.msra.mxu0 %v336
        %633 = vmatprep.subr.mxu0 0.0
        %634 = vmatpush1.xpose.msra.mxu0 %v335
        %635 = vmatprep.subr.mxu0 0.0
        %636 = vmatpush1.xpose.msra.mxu0 %v334
        %637 = vmatprep.subr.mxu0 0.0
        %638 = vmatpush1.xpose.msra.mxu0 %v333
        %639 = vmatprep.subr.mxu0 0.0
        %640 = vmatpush1.xpose.msra.mxu0 %v332
        %641 = vmatprep.subr.mxu0 0.0
        %642 = vmatpush1.xpose.msra.mxu0 %v331
        %643 = vmatprep.subr.mxu0 0.0
        %644 = vmatpush1.xpose.msra.mxu0 %v330
        %645 = vmatprep.subr.mxu0 0.0
        %646 = vmatpush1.xpose.msra.mxu0 %v329
        %647 = vmatprep.subr.mxu0 0.0
        %648 = vmatpush1.xpose.msra.mxu0 %v328
        %649 = vmatprep.subr.mxu0 0.0
        %650 = vmatpush1.xpose.msra.mxu0 %v327
        %651 = vmatprep.subr.mxu0 0.0
        %652 = vmatpush1.xpose.msra.mxu0 %v326
        %653 = vmatprep.subr.mxu0 0.0
        %654 = vmatpush2.xpose.msra.mxu0 0.0
        %655 = vmatprep.subr.mxu0 0.0
        %656 = vmatpush2.xpose.msra.mxu0 0.0
        %657 = vmatprep.subr.mxu0 0.0
        %658 = vmatpush2.xpose.msra.mxu0 0.0
        %659 = vmatprep.subr.mxu0 0.0
        %660 = vmatpush2.xpose.msra.mxu0 0.0
        %661 = vmatprep.subr.mxu0 0.0
        %662 = vmatpush2.xpose.msra.mxu0 0.0
        %663 = vmatprep.subr.mxu0 0.0
        %664 = vmatpush2.xpose.msra.mxu0 0.0
        %665 = vmatprep.subr.mxu0 0.0
        %666 = vmatpush2.xpose.msra.mxu0 0.0
        %667 = vmatprep.subr.mxu0 0.0
        %668 = vmatpush2.xpose.msra.mxu0 0.0
        %669 = vmatprep.subr.mxu0 0.0
        %670 = vmatpush2.xpose.msra.mxu0 0.0
        %671 = vmatprep.subr.mxu0 0.0
        %672 = vmatpush2.xpose.msra.mxu0 0.0
        %673 = vmatprep.subr.mxu0 0.0
        %674 = vmatpush2.xpose.msra.mxu0 0.0
        %675 = vmatprep.subr.mxu0 0.0
        %676 = vmatpush2.xpose.msra.mxu0 0.0
        %677 = vmatprep.subr.mxu0 0.0
        %678 = vmatpush2.xpose.msra.mxu0 0.0
        %679 = vmatprep.subr.mxu0 0.0
        %680 = vmatpush2.xpose.msra.mxu0 0.0
        %681 = vmatprep.subr.mxu0 0.0
        %682 = vmatpush2.xpose.msra.mxu0 0.0
        %683 = vmatprep.subr.mxu0 0.0
        %684 = vmatpush2.xpose.msra.mxu0 0.0
        %685 = vmatprep.mubr.f32.mxu0 0.0
        %686 = vmatmul.mubr.f32.gmra.mxu0 %v587
        %v687 = vpop.f32.mrf.mxu0
        %v688 = vadd.f32 %v607, %v687
        %v689 = vpop.f32.mrf.mxu0
        %690 = vmatprep.mubr.f32.mxu0 0.0
        %691 = vmatmul.mubr.f32.gmra.mxu0 %v592
        %v692 = vpop.f32.mrf.mxu0
        %v693 = vadd.f32 %v611, %v692
        %v694 = vpop.f32.mrf.mxu0
        %695 = vmatprep.mubr.f32.mxu0 0.0
        %696 = vmatmul.mubr.f32.gmra.mxu0 %v597
        %v697 = vpop.f32.mrf.mxu0
        %v698 = vadd.f32 %v615, %v697
        %v699 = vpop.f32.mrf.mxu0
        %700 = vmatprep.mubr.f32.mxu0 0.0
        %701 = vmatmul.mubr.f32.gmra.mxu0 %v602
        %v702 = vpop.f32.mrf.mxu0
        %v703 = vadd.f32 %v619, %v702
        %v704 = vpop.f32.mrf.mxu0
        %705 = vdwg.mxu0
        %v706 = vmax.f32 %v688, 0.0
        %v707 = vmax.f32 %v693, 0.0
        %v708 = vmax.f32 %v698, 0.0
        %v709 = vmax.f32 %v703, 0.0
        %710 = vset.pattern.permute.xlu0 36
        %711 = vperm.xlu0 %710, %v342
        %v712 = vpop.permute.xlu0 %711
        %714 = vset.pattern.permute.xlu0 36
        %715 = vperm.xlu0 %714, %v343
        %v716 = vpop.permute.xlu0 %715
        %718 = vset.pattern.permute.xlu0 36
        %719 = vperm.xlu0 %718, %v344
        %v720 = vpop.permute.xlu0 %719
        %722 = vset.pattern.permute.xlu0 36
        %723 = vperm.xlu0 %722, %v345
        %v724 = vpop.permute.xlu0 %723
        %v726 = vmul.f32 %v706, %v712
        %v727 = vmul.f32 %v707, %v716
        %v728 = vmul.f32 %v708, %v720
        %v729 = vmul.f32 %v709, %v724
        %v730 = vadd.f32 %v726, %v727
        %v731 = vadd.f32 %v730, %v728
        %v732 = vadd.f32 %v731, %v729
        %v733 = vrot.slane %v732, 4
        %v734 = vadd.f32 %v732, %v733
        %v735 = vrot.slane %v734, 2
        %v736 = vadd.f32 %v734, %v735
        %v737 = vrot.slane %v736, 1
        %v738 = vadd.f32 %v736, %v737
        %740 = vset.pattern.permute.xlu0 37
        %741 = vperm.xlu0 %740, %v346
        %v742 = vpop.permute.xlu0 %741
        %v744 = vadd.f32 %v738, %v742
        %v745 = vmul.f32 %v744, %v347
        %746 = vst [vmem:[%s176] sm:$0x1] %v745
        %s747 = sand.u32 %s98, 1
        %s748 = scalar_lea.sflag [#allocation4], %s747
        %s749 = sand.u32 %s98, 1
        %s750 = scalar_lea.vmem [#allocation3], %s749
        // Predicated region
        $region33: #{tpu_custom_call.1} parent=31 // pred_check
          %p751 = pneg %p108
        $region34: #{tpu_custom_call.1} parent=31 // pred_check_branch
          %753 = sbr.rel (%p751) target = $region36
        $region35: #{tpu_custom_call.1} parent=31 // pred_region
          %s755 = ssub.s32 16, 16
          %756 = vsyncadd %s748, %s755
          %s757 = smul.addr %s17, 16
          %s758 = scalar_lea.hbm %s3, %s757
          %s760 = sshll.u32 %s750, 4
          %s761 = int_to_ptr.vmem [resolvable:$true] %s760
          %763 = dma.vmem_to_hbm [thread:$0]  %s761, 16, %s758, %s748
        $region36: #{tpu_custom_call.1} parent=31 // pred_fallthru
          _
      $region32: #{tpu_custom_call.1} parent=5 // pred_fallthru
        _
      %p764 = scmp.le.s32.totalorder 2, %s12
      // Predicated region
      $region37: #{tpu_custom_call.1} parent=5 // pred_check
        %p765 = pneg %p764
      $region38: #{tpu_custom_call.1} parent=5 // pred_check_branch
        %767 = sbr.rel (%p765) target = $region40
      $region39: #{tpu_custom_call.1} parent=5 // pred_region
        %s768 = ssub.s32 %s12, 2
        // Predicated region
        $region41: #{tpu_custom_call.1} parent=39 // pred_check
          %p769 = pneg %p114
        $region42: #{tpu_custom_call.1} parent=39 // pred_check_branch
          %771 = sbr.rel (%p769) target = $region44
        $region43: #{tpu_custom_call.1} parent=39 // pred_region
          %s772 = sand.u32 %s99, 1
          %s773 = scalar_lea.sflag [#allocation4], %s772
          %s774 = sand.u32 %s99, 1
          %s775 = scalar_lea.vmem [#allocation3], %s774
          %776 = dma.done %s773, 16
        $region44: #{tpu_custom_call.1} parent=39 // pred_fallthru
          _
      $region40: #{tpu_custom_call.1} parent=5 // pred_fallthru
        _
    $region6: #{tpu_custom_call.1} parent=1 // loop_footer
      %s16 = sadd.s32 1, %s12
    $region7: #{tpu_custom_call.1} parent=1 // loop_footer_branch
      %11 = sbr.rel target = $region3
    $region8: #{tpu_custom_call.1} parent=1 // loop_exit
      _
    %777 = vsyncpa [#allocation4], 1
    %s778 = scalar_lea.sflag [#allocation4], 1
    %779 = vsyncpa %s778, 1

</llo_original>
